<compile_context>
chip_gen: v7x
topology: tpu7x:2x2x1
jax: 0.10.0
libtpu: 0.0.40
codegen_flags: <defaults>
</compile_context>

<pallas_src>
import jax
import jax.numpy as jnp
from jax.experimental import pallas as pl
from jax.experimental.pallas import tpu as pltpu

NEG_SLOPE = 0.01  # nn.LeakyReLU default


def _leaky_relu(x):
    return jnp.where(x > 0, x, NEG_SLOPE * x)


def _make_resblock_kernel(H, W, Cin, Cout, K, mxu_dtype):
    pad = K // 2
    HW = H * W
    side = pad * W + pad  # max |flat shift| of any tap

    def kernel(x_ref, w1_ref, w2_ref, o_ref):
        x = x_ref[0]                                        # (Cin, H*W), lane-dense

        # lane index -> column coordinate; per-tap column validity masks
        # (VPU-only).  Row-OOB taps are covered by the zero end-pads below.
        wo = jax.lax.broadcasted_iota(jnp.int32, (1, HW), 1) % W
        valid_w = [(wo + (dw - pad) >= 0) & (wo + (dw - pad) < W) for dw in range(K)]
        ones_row = jnp.ones((1, HW), mxu_dtype)

        def patches(a, C):
            """im2col: (C, H*W) -> (K*K*C + 1, H*W); row (dh*K+dw)*C + c holds
            a[c] shifted by tap (dh, dw), zero where the tap falls in the conv
            padding region; last row is ones (folds the bias)."""
            z = jnp.zeros((C, side), a.dtype)
            aw = jnp.concatenate([z, a, z], axis=1)          # zero fill handles dh OOB
            rows = []
            for dh in range(K):
                for dw in range(K):
                    off = (dh - pad) * W + (dw - pad)
                    tap = aw[:, side + off: side + off + HW]  # lane shift by `off`
                    if dw != pad:                             # centre column never OOB
                        tap = jnp.where(valid_w[dw], tap, 0.0)
                    rows.append(tap.astype(mxu_dtype))
            rows.append(ones_row)
            return jnp.concatenate(rows, axis=0)

        # ---- stage 1: conv 3x3 (pad=1) + residual 1x1 + both biases ----------
        # single MXU matmul: (2*Cout, K*K*Cin+1) x (K*K*Cin+1, H*W)
        p1 = patches(x, Cin)
        y1 = jnp.dot(w1_ref[...], p1,
                     preferred_element_type=jnp.float32)     # (2*Cout, H*W)
        h1 = _leaky_relu(y1[:Cout])                          # block branch
        res = y1[Cout:]                                      # residual branch

        # ---- stage 2: conv 3x3 (stride 1, pad=1) + bias ----------------------
        # single MXU matmul: (Cout, K*K*Cout+1) x (K*K*Cout+1, H*W)
        p2 = patches(h1.astype(mxu_dtype), Cout)
        y2 = jnp.dot(w2_ref[...], p2,
                     preferred_element_type=jnp.float32)     # (Cout, H*W)

        o_ref[0] = (res + _leaky_relu(y2)).astype(o_ref.dtype)

    return kernel


def resblock_forward(x_nchw, params, *, kernel_size=3, stride=1,
                     mxu_dtype=jnp.float32):
    """x_nchw: (N, Cin, H, W) float32 -> (N, Cout, H, W) float32."""
    w1, b1, w2, b2, wr, br = params   # w*: HWIO, b*: (Cout,), wr: (Cin, Cout)
    N, Cin, H, W = x_nchw.shape
    Cout = w1.shape[-1]
    K = kernel_size
    assert K % 2 == 1, "odd kernel_size expected (padding = kernel_size // 2)"
    if stride != 1:
        # TODO(synk): strided downsampling path not implemented in the
        # lane-dense im2col kernel (module default stride=1 is covered).
        raise NotImplementedError("stride != 1 not supported by this kernel")
    pad = K // 2
    HW = H * W

    # Lane-dense boundary layout: order-preserving reshape only (no transpose,
    # no HBM padding pass).  Channels ride the sublane axis, spatial the lanes.
    x_flat = x_nchw.reshape(N, Cin, HW)

    # Fold conv1 + residual 1x1 + biases into ONE weight matrix (2*Cout, K*K*Cin+1):
    #   rows [0:Cout]      -> conv1 weights, last column = b1
    #   rows [Cout:2*Cout] -> residual 1x1 placed on the center tap, last col = br
    w1_t = w1.reshape(K * K * Cin, Cout).T                              # (Cout, K*K*Cin)
    wr_t = jnp.zeros((Cout, K * K * Cin), w1.dtype)
    center = (pad * K + pad) * Cin
    wr_t = wr_t.at[:, center:center + Cin].set(wr.T)
    w1cat = jnp.concatenate(
        [jnp.concatenate([w1_t, b1[:, None]], axis=1),
         jnp.concatenate([wr_t, br[:, None]], axis=1)], axis=0)         # (2*Cout, K*K*Cin+1)
    w2cat = jnp.concatenate(
        [w2.reshape(K * K * Cout, Cout).T, b2[:, None]], axis=1)        # (Cout, K*K*Cout+1)
    # Cast once on the host side (no per-grid-step in-kernel casts).
    w1cat = w1cat.astype(mxu_dtype)
    w2cat = w2cat.astype(mxu_dtype)

    kernel = _make_resblock_kernel(H, W, Cin, Cout, K, mxu_dtype)

    flops = 2 * N * HW * Cout * (K * K * Cin + K * K * Cout + Cin)
    bytes_accessed = (x_flat.size * x_flat.dtype.itemsize
                      + w1cat.size * w1cat.dtype.itemsize
                      + w2cat.size * w2cat.dtype.itemsize
                      + N * Cout * HW * 4)

    out_flat = pl.pallas_call(
        kernel,
        out_shape=jax.ShapeDtypeStruct((N, Cout, HW), jnp.float32),
        grid_spec=pltpu.PrefetchScalarGridSpec(
            num_scalar_prefetch=0,
            grid=(N,),  # one image per step; fully independent -> "parallel"
            in_specs=[
                pl.BlockSpec((1, Cin, HW), lambda n: (n, 0, 0)),
                pl.BlockSpec((2 * Cout, K * K * Cin + 1), lambda n: (0, 0)),
                pl.BlockSpec((Cout, K * K * Cout + 1), lambda n: (0, 0)),
            ],
            out_specs=pl.BlockSpec((1, Cout, HW), lambda n: (n, 0, 0)),
        ),
        compiler_params=pltpu.CompilerParams(
            dimension_semantics=("parallel",),
            vmem_limit_bytes=32 * 1024 * 1024),
        cost_estimate=pl.CostEstimate(flops=flops, transcendentals=0,
                                      bytes_accessed=bytes_accessed),
    )(x_flat, w1cat, w2cat)

    return out_flat.reshape(N, Cout, H, W)   # order-preserving reshape back to NCHW


def _reference_forward(x_nchw, params, *, kernel_size=3, stride=1):
    """Pure-JAX reference (mirrors the PyTorch module) for validation."""
    w1, b1, w2, b2, wr, br = params
    pad = kernel_size // 2
    x = jnp.transpose(x_nchw, (0, 2, 3, 1))
    dn = ('NHWC', 'HWIO', 'NHWC')

    def conv(inp, w, b, s, p):
        y = jax.lax.conv_general_dilated(inp, w, (s, s), [(p, p), (p, p)],
                                         dimension_numbers=dn)
        return y + b.reshape(1, 1, 1, -1)

    h = _leaky_relu(conv(x, w1, b1, stride, pad))
    h = _leaky_relu(conv(h, w2, b2, 1, pad))
    r = conv(x, wr.reshape(1, 1, *wr.shape), br, stride, 0)
    return jnp.transpose(r + h, (0, 3, 1, 2))


def init_params(key, in_ch, out_ch, kernel_size=3):
    ks = jax.random.split(key, 6)
    scale1 = 1.0 / (in_ch * kernel_size * kernel_size) ** 0.5
    scale2 = 1.0 / (out_ch * kernel_size * kernel_size) ** 0.5
    scaler = 1.0 / in_ch ** 0.5
    w1 = scale1 * jax.random.normal(ks[0], (kernel_size, kernel_size, in_ch, out_ch), jnp.float32)
    b1 = scale1 * jax.random.normal(ks[1], (out_ch,), jnp.float32)
    w2 = scale2 * jax.random.normal(ks[2], (kernel_size, kernel_size, out_ch, out_ch), jnp.float32)
    b2 = scale2 * jax.random.normal(ks[3], (out_ch,), jnp.float32)
    wr = scaler * jax.random.normal(ks[4], (in_ch, out_ch), jnp.float32)   # 1x1 conv
    br = scaler * jax.random.normal(ks[5], (out_ch,), jnp.float32)
    return (w1, b1, w2, b2, wr, br)


if __name__ == "__main__":
    key = jax.random.PRNGKey(0)
    k_x, k_p = jax.random.split(key)

    N, Cin, Cout, H, W = 2, 4, 8, 16, 16  # module defaults: stride=1, res_connect='conv'

    x = jax.random.normal(k_x, (N, Cin, H, W), jnp.float32)
    params = init_params(k_p, Cin, Cout, kernel_size=3)

    out = resblock_forward(x, params, kernel_size=3, stride=1)
    out = jax.block_until_ready(out)

    ref = _reference_forward(x, params, kernel_size=3, stride=1)
    assert out.shape == (N, Cout, H, W)
    assert jnp.allclose(out, ref, atol=1e-4, rtol=1e-4), "mismatch vs reference"

    print("KERNEL_OK")
</pallas_src>

<mosaic_0001>
module attributes {stable_mosaic.version = 11 : i64} {
  func.func @kernel(%arg0: i32, %arg1: memref<1x4x256xf32, #tpu.memory_space<vmem>>, %arg2: memref<16x37xf32, #tpu.memory_space<vmem>>, %arg3: memref<8x73xf32, #tpu.memory_space<vmem>>, %arg4: memref<1x8x256xf32, #tpu.memory_space<vmem>>) attributes {dimension_semantics = [#tpu.dimension_semantics<parallel>], iteration_bounds = array<i64: 2>, scalar_prefetch = 0 : i64, scratch_operands = 0 : i64, tpu.core_type = #tpu.core_type<tc>, window_params = [{transform_indices = @transform_0, window_bounds = array<i64: 1, 4, 256>}, {pipeline_mode = #tpu.pipeline_mode<synchronous>, transform_indices = @transform_1, window_bounds = array<i64: 16, 37>}, {pipeline_mode = #tpu.pipeline_mode<synchronous>, transform_indices = @transform_2, window_bounds = array<i64: 8, 73>}, {transform_indices = @transform_3, window_bounds = array<i64: 1, 8, 256>}]} {
    %c0 = arith.constant 0 : index
    %c0_0 = arith.constant 0 : index
    %c0_1 = arith.constant 0 : index
    %0 = vector.load %arg1[%c0, %c0_0, %c0_1] : memref<1x4x256xf32, #tpu.memory_space<vmem>>, vector<1x4x256xf32>
    %1 = vector.shape_cast %0 : vector<1x4x256xf32> to vector<4x256xf32>
    %2 = tpu.iota {dimensions = array<i32: 1>} : vector<1x256xi32>
    %c16_i32 = arith.constant 16 : i32
    %c0_i32 = arith.constant 0 : i32
    %3 = arith.cmpi eq, %c16_i32, %c0_i32 : i32
    %c1_i32 = arith.constant 1 : i32
    %4 = arith.select %3, %c1_i32, %c16_i32 : i32
    %5 = vector.broadcast %4 : i32 to vector<1x256xi32>
    %6 = arith.remsi %2, %5 : vector<1x256xi32>
    %c0_i32_2 = arith.constant 0 : i32
    %7 = vector.broadcast %c0_i32_2 : i32 to vector<1x256xi32>
    %8 = arith.cmpi ne, %6, %7 : vector<1x256xi32>
    %c0_i32_3 = arith.constant 0 : i32
    %9 = vector.broadcast %c0_i32_3 : i32 to vector<1x256xi32>
    %10 = arith.cmpi slt, %6, %9 : vector<1x256xi32>
    %c0_i32_4 = arith.constant 0 : i32
    %11 = arith.cmpi slt, %4, %c0_i32_4 : i32
    %12 = vector.broadcast %11 : i1 to vector<1x256xi1>
    %13 = vector.broadcast %12 : vector<1x256xi1> to vector<1x256xi1>
    %14 = arith.xori %10, %13 : vector<1x256xi1>
    %15 = arith.andi %14, %8 : vector<1x256xi1>
    %16 = vector.broadcast %4 : i32 to vector<1x256xi32>
    %17 = arith.addi %6, %16 : vector<1x256xi32>
    %18 = arith.select %15, %17, %6 : vector<1x256xi1>, vector<1x256xi32>
    %c-1_i32 = arith.constant -1 : i32
    %19 = vector.broadcast %c-1_i32 : i32 to vector<1x256xi32>
    %20 = arith.addi %18, %19 : vector<1x256xi32>
    %c0_i32_5 = arith.constant 0 : i32
    %21 = vector.broadcast %c0_i32_5 : i32 to vector<1x256xi32>
    %22 = arith.cmpi sge, %20, %21 : vector<1x256xi32>
    %c-1_i32_6 = arith.constant -1 : i32
    %23 = vector.broadcast %c-1_i32_6 : i32 to vector<1x256xi32>
    %24 = arith.addi %18, %23 : vector<1x256xi32>
    %c16_i32_7 = arith.constant 16 : i32
    %25 = vector.broadcast %c16_i32_7 : i32 to vector<1x256xi32>
    %26 = arith.cmpi slt, %24, %25 : vector<1x256xi32>
    %27 = arith.andi %22, %26 : vector<1x256xi1>
    %c1_i32_8 = arith.constant 1 : i32
    %28 = vector.broadcast %c1_i32_8 : i32 to vector<1x256xi32>
    %29 = arith.addi %18, %28 : vector<1x256xi32>
    %c0_i32_9 = arith.constant 0 : i32
    %30 = vector.broadcast %c0_i32_9 : i32 to vector<1x256xi32>
    %31 = arith.cmpi sge, %29, %30 : vector<1x256xi32>
    %c1_i32_10 = arith.constant 1 : i32
    %32 = vector.broadcast %c1_i32_10 : i32 to vector<1x256xi32>
    %33 = arith.addi %18, %32 : vector<1x256xi32>
    %c16_i32_11 = arith.constant 16 : i32
    %34 = vector.broadcast %c16_i32_11 : i32 to vector<1x256xi32>
    %35 = arith.cmpi slt, %33, %34 : vector<1x256xi32>
    %36 = arith.andi %31, %35 : vector<1x256xi1>
    %cst = arith.constant 1.000000e+00 : f32
    %37 = vector.broadcast %cst : f32 to vector<1x256xf32>
    %cst_12 = arith.constant 0.000000e+00 : f32
    %38 = vector.broadcast %cst_12 : f32 to vector<4x17xf32>
    %39 = tpu.concatenate %38, %1, %38 in 1 : vector<4x17xf32>, vector<4x256xf32>, vector<4x17xf32> -> vector<4x290xf32>
    %40 = vector.extract_strided_slice %39 {offsets = [0, 0], sizes = [4, 256], strides = [1, 1]} : vector<4x290xf32> to vector<4x256xf32>
    %cst_13 = arith.constant 0.000000e+00 : f32
    %41 = vector.shape_cast %27 : vector<1x256xi1> to vector<1x256xi1>
    %42 = vector.broadcast %41 : vector<1x256xi1> to vector<4x256xi1>
    %43 = vector.broadcast %cst_13 : f32 to vector<4x256xf32>
    %44 = arith.select %42, %40, %43 : vector<4x256xi1>, vector<4x256xf32>
    %45 = vector.extract_strided_slice %39 {offsets = [0, 1], sizes = [4, 256], strides = [1, 1]} : vector<4x290xf32> to vector<4x256xf32>
    %46 = vector.extract_strided_slice %39 {offsets = [0, 2], sizes = [4, 256], strides = [1, 1]} : vector<4x290xf32> to vector<4x256xf32>
    %cst_14 = arith.constant 0.000000e+00 : f32
    %47 = vector.shape_cast %36 : vector<1x256xi1> to vector<1x256xi1>
    %48 = vector.broadcast %47 : vector<1x256xi1> to vector<4x256xi1>
    %49 = vector.broadcast %cst_14 : f32 to vector<4x256xf32>
    %50 = arith.select %48, %46, %49 : vector<4x256xi1>, vector<4x256xf32>
    %51 = vector.extract_strided_slice %39 {offsets = [0, 16], sizes = [4, 256], strides = [1, 1]} : vector<4x290xf32> to vector<4x256xf32>
    %cst_15 = arith.constant 0.000000e+00 : f32
    %52 = vector.shape_cast %27 : vector<1x256xi1> to vector<1x256xi1>
    %53 = vector.broadcast %52 : vector<1x256xi1> to vector<4x256xi1>
    %54 = vector.broadcast %cst_15 : f32 to vector<4x256xf32>
    %55 = arith.select %53, %51, %54 : vector<4x256xi1>, vector<4x256xf32>
    %56 = vector.extract_strided_slice %39 {offsets = [0, 17], sizes = [4, 256], strides = [1, 1]} : vector<4x290xf32> to vector<4x256xf32>
    %57 = vector.extract_strided_slice %39 {offsets = [0, 18], sizes = [4, 256], strides = [1, 1]} : vector<4x290xf32> to vector<4x256xf32>
    %cst_16 = arith.constant 0.000000e+00 : f32
    %58 = vector.shape_cast %36 : vector<1x256xi1> to vector<1x256xi1>
    %59 = vector.broadcast %58 : vector<1x256xi1> to vector<4x256xi1>
    %60 = vector.broadcast %cst_16 : f32 to vector<4x256xf32>
    %61 = arith.select %59, %57, %60 : vector<4x256xi1>, vector<4x256xf32>
    %62 = vector.extract_strided_slice %39 {offsets = [0, 32], sizes = [4, 256], strides = [1, 1]} : vector<4x290xf32> to vector<4x256xf32>
    %cst_17 = arith.constant 0.000000e+00 : f32
    %63 = vector.shape_cast %27 : vector<1x256xi1> to vector<1x256xi1>
    %64 = vector.broadcast %63 : vector<1x256xi1> to vector<4x256xi1>
    %65 = vector.broadcast %cst_17 : f32 to vector<4x256xf32>
    %66 = arith.select %64, %62, %65 : vector<4x256xi1>, vector<4x256xf32>
    %67 = vector.extract_strided_slice %39 {offsets = [0, 33], sizes = [4, 256], strides = [1, 1]} : vector<4x290xf32> to vector<4x256xf32>
    %68 = vector.extract_strided_slice %39 {offsets = [0, 34], sizes = [4, 256], strides = [1, 1]} : vector<4x290xf32> to vector<4x256xf32>
    %cst_18 = arith.constant 0.000000e+00 : f32
    %69 = vector.shape_cast %36 : vector<1x256xi1> to vector<1x256xi1>
    %70 = vector.broadcast %69 : vector<1x256xi1> to vector<4x256xi1>
    %71 = vector.broadcast %cst_18 : f32 to vector<4x256xf32>
    %72 = arith.select %70, %68, %71 : vector<4x256xi1>, vector<4x256xf32>
    %73 = tpu.concatenate %44, %45, %50, %55, %56, %61, %66, %67, %72, %37 in 0 : vector<4x256xf32>, vector<4x256xf32>, vector<4x256xf32>, vector<4x256xf32>, vector<4x256xf32>, vector<4x256xf32>, vector<4x256xf32>, vector<4x256xf32>, vector<4x256xf32>, vector<1x256xf32> -> vector<37x256xf32>
    %c0_19 = arith.constant 0 : index
    %c0_20 = arith.constant 0 : index
    %74 = vector.load %arg2[%c0_19, %c0_20] : memref<16x37xf32, #tpu.memory_space<vmem>>, vector<16x37xf32>
    %cst_21 = arith.constant dense<0.000000e+00> : vector<16x256xf32>
    %75 = tpu.matmul %74, %73, %cst_21 {dimension_numbers = #tpu.dot_dimension_numbers<[1], [0], [0], [1], [0, 0, 1, 1], [], []>} : vector<16x37xf32>, vector<37x256xf32>, vector<16x256xf32> -> vector<16x256xf32>
    %76 = vector.extract_strided_slice %75 {offsets = [0, 0], sizes = [8, 256], strides = [1, 1]} : vector<16x256xf32> to vector<8x256xf32>
    %cst_22 = arith.constant 0.000000e+00 : f32
    %77 = vector.broadcast %cst_22 : f32 to vector<8x256xf32>
    %78 = arith.cmpf ogt, %76, %77 : vector<8x256xf32>
    %cst_23 = arith.constant 0.00999999977 : f32
    %79 = vector.broadcast %cst_23 : f32 to vector<8x256xf32>
    %80 = arith.mulf %79, %76 : vector<8x256xf32>
    %81 = arith.select %78, %76, %80 : vector<8x256xi1>, vector<8x256xf32>
    %82 = vector.extract_strided_slice %75 {offsets = [8, 0], sizes = [8, 256], strides = [1, 1]} : vector<16x256xf32> to vector<8x256xf32>
    %cst_24 = arith.constant 0.000000e+00 : f32
    %83 = vector.broadcast %cst_24 : f32 to vector<8x17xf32>
    %84 = tpu.concatenate %83, %81, %83 in 1 : vector<8x17xf32>, vector<8x256xf32>, vector<8x17xf32> -> vector<8x290xf32>
    %85 = vector.extract_strided_slice %84 {offsets = [0, 0], sizes = [8, 256], strides = [1, 1]} : vector<8x290xf32> to vector<8x256xf32>
    %cst_25 = arith.constant 0.000000e+00 : f32
    %86 = vector.shape_cast %27 : vector<1x256xi1> to vector<1x256xi1>
    %87 = vector.broadcast %86 : vector<1x256xi1> to vector<8x256xi1>
    %88 = vector.broadcast %cst_25 : f32 to vector<8x256xf32>
    %89 = arith.select %87, %85, %88 : vector<8x256xi1>, vector<8x256xf32>
    %90 = vector.extract_strided_slice %84 {offsets = [0, 1], sizes = [8, 256], strides = [1, 1]} : vector<8x290xf32> to vector<8x256xf32>
    %91 = vector.extract_strided_slice %84 {offsets = [0, 2], sizes = [8, 256], strides = [1, 1]} : vector<8x290xf32> to vector<8x256xf32>
    %cst_26 = arith.constant 0.000000e+00 : f32
    %92 = vector.shape_cast %36 : vector<1x256xi1> to vector<1x256xi1>
    %93 = vector.broadcast %92 : vector<1x256xi1> to vector<8x256xi1>
    %94 = vector.broadcast %cst_26 : f32 to vector<8x256xf32>
    %95 = arith.select %93, %91, %94 : vector<8x256xi1>, vector<8x256xf32>
    %96 = vector.extract_strided_slice %84 {offsets = [0, 16], sizes = [8, 256], strides = [1, 1]} : vector<8x290xf32> to vector<8x256xf32>
    %cst_27 = arith.constant 0.000000e+00 : f32
    %97 = vector.shape_cast %27 : vector<1x256xi1> to vector<1x256xi1>
    %98 = vector.broadcast %97 : vector<1x256xi1> to vector<8x256xi1>
    %99 = vector.broadcast %cst_27 : f32 to vector<8x256xf32>
    %100 = arith.select %98, %96, %99 : vector<8x256xi1>, vector<8x256xf32>
    %101 = vector.extract_strided_slice %84 {offsets = [0, 17], sizes = [8, 256], strides = [1, 1]} : vector<8x290xf32> to vector<8x256xf32>
    %102 = vector.extract_strided_slice %84 {offsets = [0, 18], sizes = [8, 256], strides = [1, 1]} : vector<8x290xf32> to vector<8x256xf32>
    %cst_28 = arith.constant 0.000000e+00 : f32
    %103 = vector.shape_cast %36 : vector<1x256xi1> to vector<1x256xi1>
    %104 = vector.broadcast %103 : vector<1x256xi1> to vector<8x256xi1>
    %105 = vector.broadcast %cst_28 : f32 to vector<8x256xf32>
    %106 = arith.select %104, %102, %105 : vector<8x256xi1>, vector<8x256xf32>
    %107 = vector.extract_strided_slice %84 {offsets = [0, 32], sizes = [8, 256], strides = [1, 1]} : vector<8x290xf32> to vector<8x256xf32>
    %cst_29 = arith.constant 0.000000e+00 : f32
    %108 = vector.shape_cast %27 : vector<1x256xi1> to vector<1x256xi1>
    %109 = vector.broadcast %108 : vector<1x256xi1> to vector<8x256xi1>
    %110 = vector.broadcast %cst_29 : f32 to vector<8x256xf32>
    %111 = arith.select %109, %107, %110 : vector<8x256xi1>, vector<8x256xf32>
    %112 = vector.extract_strided_slice %84 {offsets = [0, 33], sizes = [8, 256], strides = [1, 1]} : vector<8x290xf32> to vector<8x256xf32>
    %113 = vector.extract_strided_slice %84 {offsets = [0, 34], sizes = [8, 256], strides = [1, 1]} : vector<8x290xf32> to vector<8x256xf32>
    %cst_30 = arith.constant 0.000000e+00 : f32
    %114 = vector.shape_cast %36 : vector<1x256xi1> to vector<1x256xi1>
    %115 = vector.broadcast %114 : vector<1x256xi1> to vector<8x256xi1>
    %116 = vector.broadcast %cst_30 : f32 to vector<8x256xf32>
    %117 = arith.select %115, %113, %116 : vector<8x256xi1>, vector<8x256xf32>
    %118 = tpu.concatenate %89, %90, %95, %100, %101, %106, %111, %112, %117, %37 in 0 : vector<8x256xf32>, vector<8x256xf32>, vector<8x256xf32>, vector<8x256xf32>, vector<8x256xf32>, vector<8x256xf32>, vector<8x256xf32>, vector<8x256xf32>, vector<8x256xf32>, vector<1x256xf32> -> vector<73x256xf32>
    %c0_31 = arith.constant 0 : index
    %c0_32 = arith.constant 0 : index
    %119 = vector.load %arg3[%c0_31, %c0_32] : memref<8x73xf32, #tpu.memory_space<vmem>>, vector<8x73xf32>
    %cst_33 = arith.constant dense<0.000000e+00> : vector<8x256xf32>
    %120 = tpu.matmul %119, %118, %cst_33 {dimension_numbers = #tpu.dot_dimension_numbers<[1], [0], [0], [1], [0, 0, 1, 1], [], []>} : vector<8x73xf32>, vector<73x256xf32>, vector<8x256xf32> -> vector<8x256xf32>
    %cst_34 = arith.constant 0.000000e+00 : f32
    %121 = vector.broadcast %cst_34 : f32 to vector<8x256xf32>
    %122 = arith.cmpf ogt, %120, %121 : vector<8x256xf32>
    %cst_35 = arith.constant 0.00999999977 : f32
    %123 = vector.broadcast %cst_35 : f32 to vector<8x256xf32>
    %124 = arith.mulf %123, %120 : vector<8x256xf32>
    %125 = arith.select %122, %120, %124 : vector<8x256xi1>, vector<8x256xf32>
    %126 = arith.addf %82, %125 : vector<8x256xf32>
    %c0_36 = arith.constant 0 : index
    %c0_37 = arith.constant 0 : index
    %c0_38 = arith.constant 0 : index
    %127 = vector.load %arg4[%c0_36, %c0_37, %c0_38] : memref<1x8x256xf32, #tpu.memory_space<vmem>>, vector<1x8x256xf32>
    %128 = vector.shape_cast %127 : vector<1x8x256xf32> to vector<8x256xf32>
    %129 = vector.shape_cast %126 : vector<8x256xf32> to vector<1x8x256xf32>
    tpu.vector_store %arg4[%c0_36, %c0_37, %c0_38], %129 {strides = array<i32>} : memref<1x8x256xf32, #tpu.memory_space<vmem>>, vector<1x8x256xf32>,
    return
  }
  func.func @transform_0(%arg0: i32) -> (i32, i32, i32) {
    %c0_i32 = arith.constant 0 : i32
    %c0_i32_0 = arith.constant 0 : i32
    %c0_i32_1 = arith.constant 0 : i32
    return %arg0, %c0_i32, %c0_i32_0 : i32, i32, i32
  }
  func.func @transform_1(%arg0: i32) -> (i32, i32) {
    %c0_i32 = arith.constant 0 : i32
    %c0_i32_0 = arith.constant 0 : i32
    %c0_i32_1 = arith.constant 0 : i32
    return %c0_i32, %c0_i32_0 : i32, i32
  }
  func.func @transform_2(%arg0: i32) -> (i32, i32) {
    %c0_i32 = arith.constant 0 : i32
    %c0_i32_0 = arith.constant 0 : i32
    %c0_i32_1 = arith.constant 0 : i32
    return %c0_i32, %c0_i32_0 : i32, i32
  }
  func.func @transform_3(%arg0: i32) -> (i32, i32, i32) {
    %c0_i32 = arith.constant 0 : i32
    %c0_i32_0 = arith.constant 0 : i32
    %c0_i32_1 = arith.constant 0 : i32
    return %arg0, %c0_i32, %c0_i32_0 : i32, i32, i32
  }
}

</mosaic_0001>

<llo_original>
// kernel: tpu_custom_call.1
$region0: #{tpu_custom_call.1}
  #allocation0 [shape = 'u32[]', space=smem, size = 0x4, offset = 0x4, fixed_abs, tag = 'smem constant byte address 0x4 - core index']
  #allocation1 [shape = 'u32[144,128]{1,0:T(1,128)}', space=vmem, size = 0x12000, scoped, tag = 'internal scratch']
  %s0 = inlined_call_operand.hbm [shape: f32[2,4,256], index: 0, kind: input, shape index: {}]
  %s1 = inlined_call_operand.hbm [shape: f32[16,37], index: 1, kind: input, shape index: {}]
  %s2 = inlined_call_operand.hbm [shape: f32[8,73], index: 2, kind: input, shape index: {}]
  %s3 = inlined_call_operand.hbm [shape: f32[2,8,256], index: 3, kind: output, shape index: {}]
  %s4 = sld [smem:[#allocation0]]
  $region57: #{tpu_custom_call.1} parent=0
    _
  %s6 = ssub.s32 1, %s4
  %s7 = scalar_select 0, %s6, %s4
  $region1: #{tpu_custom_call.1} parent=0
    #allocation2 [shape = 'u8[8192]{0}', space=vmem, size = 0x2000, scoped, tag = 'input window, operand 0']
    #allocation3 [shape = 's32[2]{0}', space=sflag, size = 0x8, scoped, tag = 'scoped memory for tpu_custom_call.1']
    #allocation4 [shape = 's32[2]{0}', space=sflag, size = 0x8, scoped, tag = 'scoped memory for tpu_custom_call.1']
    #allocation5 [shape = 'u8[8192]{0}', space=vmem, size = 0x2000, scoped, tag = 'input window, operand 1, single buffered']
    #allocation6 [shape = 's32[1]{0}', space=sflag, size = 0x4, scoped, tag = 'scoped memory for tpu_custom_call.1']
    #allocation7 [shape = 'u8[4096]{0}', space=vmem, size = 0x1000, scoped, tag = 'input window, operand 2, single buffered']
    #allocation8 [shape = 'u8[16384]{0}', space=vmem, size = 0x4000, scoped, tag = 'output window, operand 0']
    %8 = vsyncpa [#allocation3], 0
    %s9 = scalar_lea.sflag [#allocation3], 1
    %10 = vsyncpa %s9, 0
    %11 = vsyncpa [#allocation6], 0
    %12 = vsyncpa [#allocation4], 0
    %s13 = scalar_lea.sflag [#allocation4], 1
    %14 = vsyncpa %s13, 0
    loop: start=0, step=1, limit=4
    $region2: #{tpu_custom_call.1} parent=1 // loop_pre_header
      _
    $region3: #{tpu_custom_call.1} parent=1 // loop_header
      %s16 = sphi 0, %s20
      %p17 = scmp.ge.s32.totalorder %s16, 4
      %s26 = sphi 0, %s28
      %s29 = sphi 0, %s26
      %s30 = sphi 0, %s29
      %s46 = sphi 0, %s30
      %s50 = sphi 0, %s50
      %s52 = sphi 0, %s50
      %s53 = sphi 0, %s52
      %s67 = sphi 0, %s53
      %s71 = sphi 0, %s71
      %s73 = sphi 0, %s71
      %s74 = sphi 0, %s73
      %s88 = sphi 0, %s74
      %s94 = sphi 0, %s96
      %s97 = sphi 0, %s94
      %s98 = sphi 0, %s97
      %s114 = sphi 0, %s98
    $region4: #{tpu_custom_call.1} parent=1 // loop_header_branch
      %19 = sbr.rel (%p17) target = $region8
    $region5: #{tpu_custom_call.1} parent=1 // loop_body
      %s21 = ssub.s32 %s16, 1
      %s22 = ssub.s32 %s16, 2
      %s23 = sadd.s32 %s16, 1
      %s24 = ssub.s32 %s16, %s23
      %p25 = scmp.eq.s32.totalorder %s24, 0
      %s27 = sadd.s32 %s26, 1
      %s28 = scalar_select %p25, %s26, %s27
      %p31 = pneg %p25
      %p32 = scmp.eq.s32.totalorder %s16, 1
      %p33 = por %p31, %p32
      %p34 = scmp.ne.s32.totalorder %s26, %s29
      %p35 = scmp.eq.s32.totalorder %s16, 0
      %p36 = por %p34, %p35
      %p37 = scmp.ne.s32.totalorder %s26, %s29
      %p38 = scmp.eq.s32.totalorder %s21, 1
      %p39 = por %p37, %p38
      %p40 = scmp.ne.s32.totalorder %s29, %s30
      %p41 = scmp.eq.s32.totalorder %s21, 0
      %p42 = por %p40, %p41
      %p43 = scmp.ne.s32.totalorder %s29, %s30
      %p44 = scmp.eq.s32.totalorder %s22, 1
      %p45 = por %p43, %p44
      %p47 = scmp.ne.s32.totalorder %s30, %s46
      %p48 = scmp.eq.s32.totalorder %s22, 0
      %p49 = por %p47, %p48
      %s51 = sadd.s32 %s50, 1
      %p54 = scmp.eq.s32.totalorder %s16, 1
      %p55 = scmp.ne.s32.totalorder %s50, %s52
      %p56 = scmp.eq.s32.totalorder %s16, 0
      %p57 = por %p55, %p56
      %p58 = scmp.ne.s32.totalorder %s50, %s52
      %p59 = scmp.eq.s32.totalorder %s21, 1
      %p60 = por %p58, %p59
      %p61 = scmp.ne.s32.totalorder %s52, %s53
      %p62 = scmp.eq.s32.totalorder %s21, 0
      %p63 = por %p61, %p62
      %p64 = scmp.ne.s32.totalorder %s52, %s53
      %p65 = scmp.eq.s32.totalorder %s22, 1
      %p66 = por %p64, %p65
      %p68 = scmp.ne.s32.totalorder %s53, %s67
      %p69 = scmp.eq.s32.totalorder %s22, 0
      %p70 = por %p68, %p69
      %s72 = sadd.s32 %s71, 1
      %p75 = scmp.eq.s32.totalorder %s16, 1
      %p76 = scmp.ne.s32.totalorder %s71, %s73
      %p77 = scmp.eq.s32.totalorder %s16, 0
      %p78 = por %p76, %p77
      %p79 = scmp.ne.s32.totalorder %s71, %s73
      %p80 = scmp.eq.s32.totalorder %s21, 1
      %p81 = por %p79, %p80
      %p82 = scmp.ne.s32.totalorder %s73, %s74
      %p83 = scmp.eq.s32.totalorder %s21, 0
      %p84 = por %p82, %p83
      %p85 = scmp.ne.s32.totalorder %s73, %s74
      %p86 = scmp.eq.s32.totalorder %s22, 1
      %p87 = por %p85, %p86
      %p89 = scmp.ne.s32.totalorder %s74, %s88
      %p90 = scmp.eq.s32.totalorder %s22, 0
      %p91 = por %p89, %p90
      %s92 = ssub.s32 %s16, %s23
      %p93 = scmp.eq.s32.totalorder %s92, 0
      %s95 = sadd.s32 %s94, 1
      %s96 = scalar_select %p93, %s94, %s95
      %p99 = pneg %p93
      %p100 = scmp.eq.s32.totalorder %s16, 1
      %p101 = por %p99, %p100
      %p102 = scmp.ne.s32.totalorder %s94, %s97
      %p103 = scmp.eq.s32.totalorder %s16, 0
      %p104 = por %p102, %p103
      %p105 = scmp.ne.s32.totalorder %s94, %s97
      %p106 = scmp.eq.s32.totalorder %s21, 1
      %p107 = por %p105, %p106
      %p108 = scmp.ne.s32.totalorder %s97, %s98
      %p109 = scmp.eq.s32.totalorder %s21, 0
      %p110 = por %p108, %p109
      %p111 = scmp.ne.s32.totalorder %s97, %s98
      %p112 = scmp.eq.s32.totalorder %s22, 1
      %p113 = por %p111, %p112
      %p115 = scmp.ne.s32.totalorder %s98, %s114
      %p116 = scmp.eq.s32.totalorder %s22, 0
      %p117 = por %p115, %p116
      %p118 = scmp.le.s32.totalorder 1, %s16
      %p119 = scmp.lt.s32.totalorder %s16, 3
      %p120 = pnand %p118, %p119
      %p121 = pneg %p120
      // Predicated region
      $region9: #{tpu_custom_call.1} parent=5 // pred_check
        _
      $region10: #{tpu_custom_call.1} parent=5 // pred_check_branch
        %123 = sbr.rel (%p120) target = $region12
      $region11: #{tpu_custom_call.1} parent=5 // pred_region
        %s124 = ssub.s32 %s16, 1
        // Predicated region
        $region13: #{tpu_custom_call.1} parent=11 // pred_check
          %p125 = pneg %p63
        $region14: #{tpu_custom_call.1} parent=11 // pred_check_branch
          %127 = sbr.rel (%p125) target = $region16
        $region15: #{tpu_custom_call.1} parent=11 // pred_region
          %s129 = ssub.s32 256, 256
          %130 = vsyncadd [#allocation6], %s129
          %s131 = sshll.u32 [#allocation5], 4
          %s132 = int_to_ptr.vmem [resolvable:$true] %s131
          %137 = dma.hbm_to_vmem [thread:$0]  %s1, 256, %s132, [#allocation6], 128, 128, 8
        $region16: #{tpu_custom_call.1} parent=11 // pred_fallthru
          _
        // Predicated region
        $region17: #{tpu_custom_call.1} parent=11 // pred_check
          %p138 = pneg %p84
        $region18: #{tpu_custom_call.1} parent=11 // pred_check_branch
          %140 = sbr.rel (%p138) target = $region20
        $region19: #{tpu_custom_call.1} parent=11 // pred_region
          %s142 = ssub.s32 128, 128
          %143 = vsyncadd [#allocation6], %s142
          %s145 = sshll.u32 [#allocation7], 4
          %s146 = int_to_ptr.vmem [resolvable:$true] %s145
          %148 = dma.hbm_to_vmem [thread:$0]  %s2, 128, %s146, [#allocation6]
        $region20: #{tpu_custom_call.1} parent=11 // pred_fallthru
          _
      $region12: #{tpu_custom_call.1} parent=5 // pred_fallthru
        _
      %p149 = scmp.lt.s32.totalorder %s16, 2
      // Predicated region
      $region21: #{tpu_custom_call.1} parent=5 // pred_check
        %p150 = pneg %p149
      $region22: #{tpu_custom_call.1} parent=5 // pred_check_branch
        %152 = sbr.rel (%p150) target = $region24
      $region23: #{tpu_custom_call.1} parent=5 // pred_region
        // Predicated region
        $region25: #{tpu_custom_call.1} parent=23 // pred_check
          %p153 = pneg %p36
        $region26: #{tpu_custom_call.1} parent=23 // pred_check_branch
          %155 = sbr.rel (%p153) target = $region28
        $region27: #{tpu_custom_call.1} parent=23 // pred_region
          %s156 = sand.u32 %s26, 1
          %s157 = scalar_lea.sflag [#allocation3], %s156
          %s158 = sand.u32 %s26, 1
          %s159 = smul.addr %s158, 8
          %s160 = scalar_lea.vmem [#allocation2], %s159
          %s162 = ssub.s32 128, 128
          %163 = vsyncadd %s157, %s162
          %s164 = smul.addr %s16, 2
          %s165 = smul.addr %s164, 64
          %s166 = scalar_lea.hbm %s0, %s165
          %s168 = sshll.u32 %s160, 4
          %s169 = int_to_ptr.vmem [resolvable:$true] %s168
          %171 = dma.hbm_to_vmem [thread:$0]  %s166, 128, %s169, %s157
        $region28: #{tpu_custom_call.1} parent=23 // pred_fallthru
          _
      $region24: #{tpu_custom_call.1} parent=5 // pred_fallthru
        _
      %p172 = scmp.le.s32.totalorder 1, %s16
      %p173 = scmp.lt.s32.totalorder %s16, 3
      %p174 = pnand %p172, %p173
      %p175 = pneg %p174
      // Predicated region
      $region29: #{tpu_custom_call.1} parent=5 // pred_check
        _
      $region30: #{tpu_custom_call.1} parent=5 // pred_check_branch
        %177 = sbr.rel (%p174) target = $region32
      $region31: #{tpu_custom_call.1} parent=5 // pred_region
        %s178 = ssub.s32 %s16, 1
        %s179 = sand.u32 %s29, 1
        %s180 = scalar_lea.sflag [#allocation3], %s179
        %s181 = sand.u32 %s29, 1
        %s182 = smul.addr %s181, 8
        %s183 = scalar_lea.vmem [#allocation2], %s182
        // Predicated region
        $region33: #{tpu_custom_call.1} parent=31 // pred_check
          %p184 = pneg %p42
        $region34: #{tpu_custom_call.1} parent=31 // pred_check_branch
          %186 = sbr.rel (%p184) target = $region36
        $region35: #{tpu_custom_call.1} parent=31 // pred_region
          %187 = dma.done %s180, 128
        $region36: #{tpu_custom_call.1} parent=31 // pred_fallthru
          _
        // Predicated region
        $region37: #{tpu_custom_call.1} parent=31 // pred_check
          %p188 = pneg %p63
        $region38: #{tpu_custom_call.1} parent=31 // pred_check_branch
          %190 = sbr.rel (%p188) target = $region40
        $region39: #{tpu_custom_call.1} parent=31 // pred_region
          %191 = dma.done [#allocation6], 256
        $region40: #{tpu_custom_call.1} parent=31 // pred_fallthru
          _
        // Predicated region
        $region41: #{tpu_custom_call.1} parent=31 // pred_check
          %p192 = pneg %p84
        $region42: #{tpu_custom_call.1} parent=31 // pred_check_branch
          %194 = sbr.rel (%p192) target = $region44
        $region43: #{tpu_custom_call.1} parent=31 // pred_region
          %195 = dma.done [#allocation6], 128
        $region44: #{tpu_custom_call.1} parent=31 // pred_fallthru
          _
        %s196 = sand.u32 %s29, 1
        %s197 = scalar_lea.sflag [#allocation3], %s196
        %s198 = sand.u32 %s29, 1
        %s199 = smul.addr %s198, 8
        %s200 = scalar_lea.vmem [#allocation2], %s199
        %p201 = pneg %p42
        %p202 = pneg %p39
        %p203 = pneg %p63
        %p204 = pneg %p60
        %p205 = pneg %p84
        %p206 = pneg %p81
        %p207 = pneg %p110
        %p208 = pneg %p107
        %s209 = sand.u32 %s97, 1
        %s210 = scalar_lea.sflag [#allocation4], %s209
        %s211 = sand.u32 %s97, 1
        %s212 = smul.addr %s211, 16
        %s213 = scalar_lea.vmem [#allocation8], %s212
        %v214 = vld [vmem:[%s183] sm:$0xff]
        %v215 = vlaneseq
        %v216 = vand.u32 %v215, 127
        %v217 = vadd.s32 %v216, 128
        %vm218 = vcmp.lt.s32.totalorder %v216, 0
        %v219 = vsub.s32 0, %v216
        %v220 = vsel %vm218, %v219, %v216
        %v221 = vshrl.u32 %v220, 4
        %v222 = vand.u32 %v220, 15
        %v223 = vsub.s32 0, %v222
        %v224 = vsel %vm218, %v223, %v222
        %vm225 = vcmp.lt.s32.totalorder %v217, 0
        %v226 = vsub.s32 0, %v217
        %v227 = vsel %vm225, %v226, %v217
        %v228 = vshrl.u32 %v227, 4
        %v229 = vand.u32 %v227, 15
        %v230 = vsub.s32 0, %v229
        %v231 = vsel %vm225, %v230, %v229
        %vm232 = vcmp.ne.s32.totalorder %v224, 0
        %vm233 = vcmp.ne.s32.totalorder %v231, 0
        %vm234 = vcmp.lt.s32.totalorder %v224, 0
        %vm235 = vcmp.lt.s32.totalorder %v231, 0
        %vm236 = vmand %vm234, %vm232
        %vm237 = vmand %vm235, %vm233
        %v238 = vadd.s32 %v224, 16
        %v239 = vadd.s32 %v231, 16
        %v240 = vsel %vm236, %v238, %v224
        %v241 = vsel %vm237, %v239, %v231
        %v242 = vadd.s32 %v240, 4294967295
        %v243 = vadd.s32 %v241, 4294967295
        %vm244 = vcmp.ge.s32.totalorder %v242, 0
        %vm245 = vcmp.ge.s32.totalorder %v243, 0
        %vm246 = vcmp.lt.s32.totalorder %v242, 16
        %vm247 = vcmp.lt.s32.totalorder %v243, 16
        %vm248 = vmand %vm244, %vm246
        %vm249 = vmand %vm245, %vm247
        %v250 = vadd.s32 %v240, 1
        %v251 = vadd.s32 %v241, 1
        %vm252 = vcmp.ge.s32.totalorder %v250, 0
        %vm253 = vcmp.ge.s32.totalorder %v251, 0
        %vm254 = vcmp.lt.s32.totalorder %v250, 16
        %vm255 = vcmp.lt.s32.totalorder %v251, 16
        %vm256 = vmand %vm252, %vm254
        %vm257 = vmand %vm253, %vm255
        %v259 = vcombine.high %v214, %v214
        %260 = vrot.lane.b32.xlu0 %v214, 17
        %v261 = vpop.permute.xlu0 %260
        %262 = vrot.lane.b32.xlu0 %v259, 17
        %v263 = vpop.permute.xlu0 %262
        %vm264 = vcmask 138240
        %v265 = vsel %vm264, %v261, %v263
        %v269 = vsel %vm264, 0.0, %v261
        %v270 = vsel %vm264, %v263, 0.0
        %v271 = vsel %vm248, 1, 0
        %v272 = vsel %vm249, 1, 0
        %vm273 = vcmp.eq.s32.totalorder %v271, 1
        %vm274 = vcmp.eq.s32.totalorder %v272, 1
        %v275 = vsel %vm273, %v269, 0.0
        %v276 = vsel %vm274, %v265, 0.0
        %v277 = vsel %vm256, 1, 0
        %v278 = vsel %vm257, 1, 0
        %vm279 = vcmp.eq.s32.totalorder %v277, 1
        %vm280 = vcmp.eq.s32.totalorder %v278, 1
        %283 = vrot.lane.b32.xlu0 %v269, 126
        %v284 = vpop.permute.xlu0 %283
        %285 = vrot.lane.b32.xlu0 %v265, 126
        %v286 = vpop.permute.xlu0 %285
        %287 = vrot.lane.b32.xlu0 %v270, 126
        %v288 = vpop.permute.xlu0 %287
        %vm289 = vcmask 1031168
        %v290 = vsel %vm289, %v284, %v286
        %v291 = vsel %vm289, %v286, %v288
        %v294 = vsel %vm279, %v290, 0.0
        %v295 = vsel %vm280, %v291, 0.0
        %296 = vrot.lane.b32.xlu0 %v269, 112
        %v297 = vpop.permute.xlu0 %296
        %298 = vrot.lane.b32.xlu0 %v265, 112
        %v299 = vpop.permute.xlu0 %298
        %300 = vrot.lane.b32.xlu0 %v270, 112
        %v301 = vpop.permute.xlu0 %300
        %vm302 = vcmask 916480
        %v303 = vsel %vm302, %v297, %v299
        %v304 = vsel %vm302, %v299, %v301
        %v307 = vsel %vm273, %v303, 0.0
        %v308 = vsel %vm274, %v304, 0.0
        %309 = vrot.lane.b32.xlu0 %v269, 110
        %v310 = vpop.permute.xlu0 %309
        %311 = vrot.lane.b32.xlu0 %v265, 110
        %v312 = vpop.permute.xlu0 %311
        %313 = vrot.lane.b32.xlu0 %v270, 110
        %v314 = vpop.permute.xlu0 %313
        %vm315 = vcmask 900096
        %v316 = vsel %vm315, %v310, %v312
        %v317 = vsel %vm315, %v312, %v314
        %v320 = vsel %vm279, %v316, 0.0
        %v321 = vsel %vm280, %v317, 0.0
        %322 = vrot.lane.b32.xlu0 %v269, 96
        %v323 = vpop.permute.xlu0 %322
        %324 = vrot.lane.b32.xlu0 %v265, 96
        %v325 = vpop.permute.xlu0 %324
        %326 = vrot.lane.b32.xlu0 %v270, 96
        %v327 = vpop.permute.xlu0 %326
        %vm328 = vcmask 785408
        %v329 = vsel %vm328, %v323, %v325
        %v330 = vsel %vm328, %v325, %v327
        %v333 = vsel %vm273, %v329, 0.0
        %v334 = vsel %vm274, %v330, 0.0
        %335 = vrot.lane.b32.xlu0 %v269, 94
        %v336 = vpop.permute.xlu0 %335
        %337 = vrot.lane.b32.xlu0 %v265, 94
        %v338 = vpop.permute.xlu0 %337
        %339 = vrot.lane.b32.xlu0 %v270, 94
        %v340 = vpop.permute.xlu0 %339
        %vm341 = vcmask 769024
        %v342 = vsel %vm341, %v336, %v338
        %v343 = vsel %vm341, %v338, %v340
        %v346 = vsel %vm279, %v342, 0.0
        %v347 = vsel %vm280, %v343, 0.0
        %v348 = vrot.slane %v269, 4
        %v349 = vrot.slane %v265, 4
        %v350 = vrot.slane %v270, 4
        %351 = vrot.lane.b32.xlu0 %v348, 127
        %v352 = vpop.permute.xlu0 %351
        %353 = vrot.lane.b32.xlu0 %v349, 127
        %v354 = vpop.permute.xlu0 %353
        %355 = vrot.lane.b32.xlu0 %v350, 127
        %v356 = vpop.permute.xlu0 %355
        %vm357 = vcmask 1039360
        %v358 = vsel %vm357, %v352, %v354
        %v359 = vsel %vm357, %v354, %v356
        %v364 = vrot.slane %v307, 4
        %v365 = vrot.slane %v308, 4
        %368 = vrot.lane.b32.xlu0 %v269, 111
        %v369 = vpop.permute.xlu0 %368
        %370 = vrot.lane.b32.xlu0 %v265, 111
        %v371 = vpop.permute.xlu0 %370
        %372 = vrot.lane.b32.xlu0 %v270, 111
        %v373 = vpop.permute.xlu0 %372
        %vm374 = vcmask 908288
        %v375 = vsel %vm374, %v369, %v371
        %v376 = vsel %vm374, %v371, %v373
        %v381 = vrot.slane %v320, 4
        %v382 = vrot.slane %v321, 4
        %385 = vrot.lane.b32.xlu0 %v348, 95
        %v386 = vpop.permute.xlu0 %385
        %387 = vrot.lane.b32.xlu0 %v349, 95
        %v388 = vpop.permute.xlu0 %387
        %389 = vrot.lane.b32.xlu0 %v350, 95
        %v390 = vpop.permute.xlu0 %389
        %vm391 = vcmask 777216
        %v392 = vsel %vm391, %v386, %v388
        %v393 = vsel %vm391, %v388, %v390
        %vm396 = vcmask 1043456
        %v397 = vsel %vm396, %v275, %v358
        %v398 = vsel %vm396, %v276, %v359
        %v399 = vsel %vm396, %v294, %v364
        %v400 = vsel %vm396, %v295, %v365
        %v401 = vsel %vm396, %v375, %v381
        %v402 = vsel %vm396, %v376, %v382
        %v403 = vsel %vm396, %v333, %v392
        %v404 = vsel %vm396, %v334, %v393
        %v405 = vsel %vm396, %v346, 1.0
        %v406 = vsel %vm396, %v347, 1.0
        %v407 = vld [vmem:[#allocation5] sm:$0xff]
        %v408 = vld [vmem:[#allocation5 + $0x8] sm:$0xff]
        %vm409 = vcmask 302080
        %v411 = vsel %vm409, %v407, 0
        %v414 = vsel %vm409, %v408, 0
        %vm416 = vcmask 1044480
        %v418 = vsel %vm416, %v405, 0
        %v421 = vsel %vm416, %v406, 0
        %423 = vmatprep.subr.mxu0 %v398
        %424 = vmatpush1.msra.mxu0 %v397
        %425 = vmatprep.subr.mxu0 %v400
        %426 = vmatpush1.msra.mxu0 %v399
        %427 = vmatprep.subr.mxu0 %v402
        %428 = vmatpush1.msra.mxu0 %v401
        %429 = vmatprep.subr.mxu0 %v404
        %430 = vmatpush1.msra.mxu0 %v403
        %431 = vmatprep.subr.mxu0 %v421
        %432 = vmatpush1.msra.mxu0 %v418
        %433 = vmatprep.subr.mxu0 0.0
        %434 = vmatpush1.msra.mxu0 0.0
        %435 = vmatprep.subr.mxu0 0.0
        %436 = vmatpush1.msra.mxu0 0.0
        %437 = vmatprep.subr.mxu0 0.0
        %438 = vmatpush1.msra.mxu0 0.0
        %439 = vmatprep.subr.mxu0 0.0
        %440 = vmatpush1.msra.mxu0 0.0
        %441 = vmatprep.subr.mxu0 0.0
        %442 = vmatpush1.msra.mxu0 0.0
        %443 = vmatprep.subr.mxu0 0.0
        %444 = vmatpush1.msra.mxu0 0.0
        %445 = vmatprep.subr.mxu0 0.0
        %446 = vmatpush1.msra.mxu0 0.0
        %447 = vmatprep.subr.mxu0 0.0
        %448 = vmatpush1.msra.mxu0 0.0
        %449 = vmatprep.subr.mxu0 0.0
        %450 = vmatpush1.msra.mxu0 0.0
        %451 = vmatprep.subr.mxu0 0.0
        %452 = vmatpush1.msra.mxu0 0.0
        %453 = vmatprep.subr.mxu0 0.0
        %454 = vmatpush1.msra.mxu0 0.0
        %455 = vmatprep.subr.mxu0 0.0
        %456 = vmatpush1.msra.mxu0 0.0
        %457 = vmatprep.subr.mxu0 0.0
        %458 = vmatpush1.msra.mxu0 0.0
        %459 = vmatprep.subr.mxu0 0.0
        %460 = vmatpush1.msra.mxu0 0.0
        %461 = vmatprep.subr.mxu0 0.0
        %462 = vmatpush1.msra.mxu0 0.0
        %463 = vmatprep.subr.mxu0 0.0
        %464 = vmatpush1.msra.mxu0 0.0
        %465 = vmatprep.subr.mxu0 0.0
        %466 = vmatpush1.msra.mxu0 0.0
        %467 = vmatprep.subr.mxu0 0.0
        %468 = vmatpush1.msra.mxu0 0.0
        %469 = vmatprep.subr.mxu0 0.0
        %470 = vmatpush1.msra.mxu0 0.0
        %471 = vmatprep.subr.mxu0 0.0
        %472 = vmatpush1.msra.mxu0 0.0
        %473 = vmatprep.subr.mxu0 0.0
        %474 = vmatpush1.msra.mxu0 0.0
        %475 = vmatprep.subr.mxu0 0.0
        %476 = vmatpush1.msra.mxu0 0.0
        %477 = vmatprep.subr.mxu0 0.0
        %478 = vmatpush1.msra.mxu0 0.0
        %479 = vmatprep.subr.mxu0 0.0
        %480 = vmatpush1.msra.mxu0 0.0
        %481 = vmatprep.subr.mxu0 0.0
        %482 = vmatpush1.msra.mxu0 0.0
        %483 = vmatprep.subr.mxu0 0.0
        %484 = vmatpush1.msra.mxu0 0.0
        %485 = vmatprep.subr.mxu0 0.0
        %486 = vmatpush1.msra.mxu0 0.0
        %487 = vmatprep.mubr.f32.mxu0 0.0
        %488 = vmatmul.mubr.f32.gmra.mrb[0].mxu0 %v411
        %v489 = vpop.f32.mrb[0].mxu0
        %v490 = vadd.f32 0.0, %v489
        %v491 = vpop.f32.mrb[0].mxu0
        %v492 = vadd.f32 0.0, %v491
        %493 = vmatprep.mubr.f32.mxu0 0.0
        %494 = vmatmul.mubr.f32.gmra.mrb[0].mxu0 %v414
        %v495 = vpop.f32.mrb[0].mxu0
        %v496 = vadd.f32 0.0, %v495
        %v497 = vpop.f32.mrb[0].mxu0
        %v498 = vadd.f32 0.0, %v497
        %499 = vdwg.mxu0
        %vm500 = vcmp.gt.f32.partialorder %v490, 0.0
        %vm501 = vcmp.gt.f32.partialorder %v492, 0.0
        %v502 = vmul.f32 %v490, 0.01
        %v503 = vmul.f32 %v492, 0.01
        %v504 = vsel %vm500, %v490, %v502
        %v505 = vsel %vm501, %v492, %v503
        %508 = vrot.lane.b32.xlu0 %v504, 17
        %v509 = vpop.permute.xlu0 %508
        %510 = vrot.lane.b32.xlu0 %v505, 17
        %v511 = vpop.permute.xlu0 %510
        %v512 = vsel %vm264, %v509, %v511
        %v516 = vsel %vm264, 0.0, %v509
        %v517 = vsel %vm264, %v511, 0.0
        %v518 = vsel %vm273, %v516, 0.0
        %v519 = vsel %vm274, %v512, 0.0
        %522 = vrot.lane.b32.xlu0 %v516, 126
        %v523 = vpop.permute.xlu0 %522
        %524 = vrot.lane.b32.xlu0 %v512, 126
        %v525 = vpop.permute.xlu0 %524
        %526 = vrot.lane.b32.xlu0 %v517, 126
        %v527 = vpop.permute.xlu0 %526
        %v528 = vsel %vm289, %v523, %v525
        %v529 = vsel %vm289, %v525, %v527
        %v532 = vsel %vm279, %v528, 0.0
        %v533 = vsel %vm280, %v529, 0.0
        %534 = vrot.lane.b32.xlu0 %v516, 112
        %v535 = vpop.permute.xlu0 %534
        %536 = vrot.lane.b32.xlu0 %v512, 112
        %v537 = vpop.permute.xlu0 %536
        %538 = vrot.lane.b32.xlu0 %v517, 112
        %v539 = vpop.permute.xlu0 %538
        %v540 = vsel %vm302, %v535, %v537
        %v541 = vsel %vm302, %v537, %v539
        %v544 = vsel %vm273, %v540, 0.0
        %v545 = vsel %vm274, %v541, 0.0
        %546 = vrot.lane.b32.xlu0 %v516, 110
        %v547 = vpop.permute.xlu0 %546
        %548 = vrot.lane.b32.xlu0 %v512, 110
        %v549 = vpop.permute.xlu0 %548
        %550 = vrot.lane.b32.xlu0 %v517, 110
        %v551 = vpop.permute.xlu0 %550
        %v552 = vsel %vm315, %v547, %v549
        %v553 = vsel %vm315, %v549, %v551
        %v556 = vsel %vm279, %v552, 0.0
        %v557 = vsel %vm280, %v553, 0.0
        %558 = vrot.lane.b32.xlu0 %v516, 96
        %v559 = vpop.permute.xlu0 %558
        %560 = vrot.lane.b32.xlu0 %v512, 96
        %v561 = vpop.permute.xlu0 %560
        %562 = vrot.lane.b32.xlu0 %v517, 96
        %v563 = vpop.permute.xlu0 %562
        %v564 = vsel %vm328, %v559, %v561
        %v565 = vsel %vm328, %v561, %v563
        %v568 = vsel %vm273, %v564, 0.0
        %v569 = vsel %vm274, %v565, 0.0
        %570 = vrot.lane.b32.xlu0 %v516, 94
        %v571 = vpop.permute.xlu0 %570
        %572 = vrot.lane.b32.xlu0 %v512, 94
        %v573 = vpop.permute.xlu0 %572
        %574 = vrot.lane.b32.xlu0 %v517, 94
        %v575 = vpop.permute.xlu0 %574
        %v576 = vsel %vm341, %v571, %v573
        %v577 = vsel %vm341, %v573, %v575
        %v580 = vsel %vm279, %v576, 0.0
        %v581 = vsel %vm280, %v577, 0.0
        %582 = vrot.lane.b32.xlu0 %v516, 127
        %v583 = vpop.permute.xlu0 %582
        %584 = vrot.lane.b32.xlu0 %v512, 127
        %v585 = vpop.permute.xlu0 %584
        %586 = vrot.lane.b32.xlu0 %v517, 127
        %v587 = vpop.permute.xlu0 %586
        %v588 = vsel %vm357, %v583, %v585
        %v589 = vsel %vm357, %v585, %v587
        %592 = vrot.lane.b32.xlu0 %v516, 111
        %v593 = vpop.permute.xlu0 %592
        %594 = vrot.lane.b32.xlu0 %v512, 111
        %v595 = vpop.permute.xlu0 %594
        %596 = vrot.lane.b32.xlu0 %v517, 111
        %v597 = vpop.permute.xlu0 %596
        %v598 = vsel %vm374, %v593, %v595
        %v599 = vsel %vm374, %v595, %v597
        %602 = vrot.lane.b32.xlu0 %v516, 95
        %v603 = vpop.permute.xlu0 %602
        %604 = vrot.lane.b32.xlu0 %v512, 95
        %v605 = vpop.permute.xlu0 %604
        %606 = vrot.lane.b32.xlu0 %v517, 95
        %v607 = vpop.permute.xlu0 %606
        %v608 = vsel %vm391, %v603, %v605
        %v609 = vsel %vm391, %v605, %v607
        %v612 = vld [vmem:[#allocation7] sm:$0xff]
        %vm613 = vcmask 596992
        %v615 = vsel %vm613, %v612, 0
        %vm617 = vcmask 1040384
        %v619 = vsel %vm617, 1.0, 0
        %621 = vmatprep.subr.mxu0 %v519
        %622 = vmatpush1.msra.mxu0 %v518
        %623 = vmatprep.subr.mxu0 %v589
        %624 = vmatpush1.msra.mxu0 %v588
        %625 = vmatprep.subr.mxu0 %v533
        %626 = vmatpush1.msra.mxu0 %v532
        %627 = vmatprep.subr.mxu0 %v545
        %628 = vmatpush1.msra.mxu0 %v544
        %629 = vmatprep.subr.mxu0 %v599
        %630 = vmatpush1.msra.mxu0 %v598
        %631 = vmatprep.subr.mxu0 %v557
        %632 = vmatpush1.msra.mxu0 %v556
        %633 = vmatprep.subr.mxu0 %v569
        %634 = vmatpush1.msra.mxu0 %v568
        %635 = vmatprep.subr.mxu0 %v609
        %636 = vmatpush1.msra.mxu0 %v608
        %637 = vmatprep.subr.mxu0 %v581
        %638 = vmatpush1.msra.mxu0 %v580
        %639 = vmatprep.subr.mxu0 %v619
        %640 = vmatpush1.msra.mxu0 %v619
        %641 = vmatprep.subr.mxu0 0.0
        %642 = vmatpush1.msra.mxu0 0.0
        %643 = vmatprep.subr.mxu0 0.0
        %644 = vmatpush1.msra.mxu0 0.0
        %645 = vmatprep.subr.mxu0 0.0
        %646 = vmatpush1.msra.mxu0 0.0
        %647 = vmatprep.subr.mxu0 0.0
        %648 = vmatpush1.msra.mxu0 0.0
        %649 = vmatprep.subr.mxu0 0.0
        %650 = vmatpush1.msra.mxu0 0.0
        %651 = vmatprep.subr.mxu0 0.0
        %652 = vmatpush1.msra.mxu0 0.0
        %653 = vmatprep.subr.mxu0 0.0
        %654 = vmatpush1.msra.mxu0 0.0
        %655 = vmatprep.subr.mxu0 0.0
        %656 = vmatpush1.msra.mxu0 0.0
        %657 = vmatprep.subr.mxu0 0.0
        %658 = vmatpush1.msra.mxu0 0.0
        %659 = vmatprep.subr.mxu0 0.0
        %660 = vmatpush1.msra.mxu0 0.0
        %661 = vmatprep.subr.mxu0 0.0
        %662 = vmatpush1.msra.mxu0 0.0
        %663 = vmatprep.subr.mxu0 0.0
        %664 = vmatpush1.msra.mxu0 0.0
        %665 = vmatprep.subr.mxu0 0.0
        %666 = vmatpush1.msra.mxu0 0.0
        %667 = vmatprep.subr.mxu0 0.0
        %668 = vmatpush1.msra.mxu0 0.0
        %669 = vmatprep.subr.mxu0 0.0
        %670 = vmatpush1.msra.mxu0 0.0
        %671 = vmatprep.subr.mxu0 0.0
        %672 = vmatpush1.msra.mxu0 0.0
        %673 = vmatprep.subr.mxu0 0.0
        %674 = vmatpush1.msra.mxu0 0.0
        %675 = vmatprep.subr.mxu0 0.0
        %676 = vmatpush1.msra.mxu0 0.0
        %677 = vmatprep.subr.mxu0 0.0
        %678 = vmatpush1.msra.mxu0 0.0
        %679 = vmatprep.subr.mxu0 0.0
        %680 = vmatpush1.msra.mxu0 0.0
        %681 = vmatprep.subr.mxu0 0.0
        %682 = vmatpush1.msra.mxu0 0.0
        %683 = vmatprep.subr.mxu0 0.0
        %684 = vmatpush1.msra.mxu0 0.0
        %685 = vmatprep.mubr.f32.mxu0 0.0
        %686 = vmatmul.mubr.f32.gmra.mrb[0].mxu0 %v615
        %v687 = vpop.f32.mrb[0].mxu0
        %v688 = vadd.f32 0.0, %v687
        %v689 = vpop.f32.mrb[0].mxu0
        %v690 = vadd.f32 0.0, %v689
        %691 = vdwg.mxu0
        %vm692 = vcmp.gt.f32.partialorder %v688, 0.0
        %vm693 = vcmp.gt.f32.partialorder %v690, 0.0
        %v694 = vmul.f32 %v688, 0.01
        %v695 = vmul.f32 %v690, 0.01
        %v696 = vsel %vm692, %v688, %v694
        %v697 = vsel %vm693, %v690, %v695
        %v698 = vadd.f32 %v496, %v696
        %v699 = vadd.f32 %v498, %v697
        %700 = vst [vmem:[%s213] sm:$0xff] %v698
        %701 = vst [vmem:[%s213 + $0x8] sm:$0xff] %v699
        %s702 = sand.u32 %s97, 1
        %s703 = scalar_lea.sflag [#allocation4], %s702
        %s704 = sand.u32 %s97, 1
        %s705 = smul.addr %s704, 16
        %s706 = scalar_lea.vmem [#allocation8], %s705
        // Predicated region
        $region45: #{tpu_custom_call.1} parent=31 // pred_check
          %p707 = pneg %p107
        $region46: #{tpu_custom_call.1} parent=31 // pred_check_branch
          %709 = sbr.rel (%p707) target = $region48
        $region47: #{tpu_custom_call.1} parent=31 // pred_region
          %s711 = ssub.s32 256, 256
          %712 = vsyncadd %s703, %s711
          %s713 = smul.addr %s21, 2
          %s714 = smul.addr %s713, 128
          %s715 = scalar_lea.hbm %s3, %s714
          %s717 = sshll.u32 %s706, 4
          %s718 = int_to_ptr.vmem [resolvable:$true] %s717
          %720 = dma.vmem_to_hbm [thread:$0]  %s718, 256, %s715, %s703
        $region48: #{tpu_custom_call.1} parent=31 // pred_fallthru
          _
      $region32: #{tpu_custom_call.1} parent=5 // pred_fallthru
        _
      %p721 = scmp.le.s32.totalorder 2, %s16
      // Predicated region
      $region49: #{tpu_custom_call.1} parent=5 // pred_check
        %p722 = pneg %p721
      $region50: #{tpu_custom_call.1} parent=5 // pred_check_branch
        %724 = sbr.rel (%p722) target = $region52
      $region51: #{tpu_custom_call.1} parent=5 // pred_region
        %s725 = ssub.s32 %s16, 2
        // Predicated region
        $region53: #{tpu_custom_call.1} parent=51 // pred_check
          %p726 = pneg %p113
        $region54: #{tpu_custom_call.1} parent=51 // pred_check_branch
          %728 = sbr.rel (%p726) target = $region56
        $region55: #{tpu_custom_call.1} parent=51 // pred_region
          %s729 = sand.u32 %s98, 1
          %s730 = scalar_lea.sflag [#allocation4], %s729
          %s731 = sand.u32 %s98, 1
          %s732 = smul.addr %s731, 16
          %s733 = scalar_lea.vmem [#allocation8], %s732
          %734 = dma.done %s730, 256
        $region56: #{tpu_custom_call.1} parent=51 // pred_fallthru
          _
      $region52: #{tpu_custom_call.1} parent=5 // pred_fallthru
        _
    $region6: #{tpu_custom_call.1} parent=1 // loop_footer
      %s20 = sadd.s32 1, %s16
    $region7: #{tpu_custom_call.1} parent=1 // loop_footer_branch
      %15 = sbr.rel target = $region3
    $region8: #{tpu_custom_call.1} parent=1 // loop_exit
      _
    %735 = vsyncpa [#allocation3], 1
    %s736 = scalar_lea.sflag [#allocation3], 1
    %737 = vsyncpa %s736, 1
    %738 = vsyncpa [#allocation6], 1
    %739 = vsyncpa [#allocation4], 1
    %s740 = scalar_lea.sflag [#allocation4], 1
    %741 = vsyncpa %s740, 1

</llo_original>
